<compile_context>
chip_gen: v5e
topology: v5e:2x2
jax: 0.10.0
libtpu: 0.0.40
codegen_flags: <defaults>
</compile_context>

<pallas_src>
import functools

import jax
import jax.numpy as jnp
from jax.experimental import pallas as pl
from jax.experimental.pallas import tpu as pltpu

LANES = 128
# ~2 MiB per input per pipeline buffer: 2 inputs x 2 buffers x 2 MiB = 8 MiB,
# below v5e's 16 MiB scoped-VMEM default and v6e/v7x's 32 MiB defaults.
TARGET_TILE_BYTES = 2 * 1024 * 1024
NUM_SPLITS = 2  # v7x: 2 TensorCores/chip; harmless (serial) on v5e/v6e.


def _logl2_kernel(pred_ref, targ_ref, out_ref, acc_ref, *,
                  row_tile, steps_per_split, total_steps,
                  valid_rows_last, has_empty_steps):
    c = pl.program_id(0)          # split (TensorCore) index
    i = pl.program_id(1)          # step within this split
    gstep = c * steps_per_split + i

    @pl.when(i == 0)
    def _init():
        acc_ref[...] = jnp.zeros_like(acc_ref)

    def _sq():
        # Widen BEFORE subtracting (bf16/fp8-safe); square on the VPU.
        d = pred_ref[...].astype(jnp.float32) - targ_ref[...].astype(jnp.float32)
        return d * d

    def _accum(sq):
        # VPU-only partial accumulation into the (8, 128) vector accumulator
        # (vreg-wise adds; no cross-lane/sublane traffic in the hot loop).
        if row_tile % 8 == 0:
            acc_ref[...] += sq.reshape(row_tile // 8, 8, LANES).sum(axis=0)
        else:
            # Only reachable when the whole problem is a single small block.
            acc_ref[0:1, :] += sq.sum(axis=0, keepdims=True)

    needs_mask = valid_rows_last != row_tile  # trace-time decision

    if not needs_mask:
        if has_empty_steps:
            @pl.when(gstep < total_steps)
            def _body():
                _accum(_sq())
        else:
            _accum(_sq())
    else:
        # Full blocks: no masking work at all in the hot loop.
        @pl.when(gstep < total_steps - 1)
        def _body_full():
            _accum(_sq())

        # Only the final data block pays for the mask (single iota + compare);
        # empty (padded) steps fall through both branches and add nothing.
        @pl.when(gstep == total_steps - 1)
        def _body_last():
            sq = _sq()
            row_idx = jax.lax.broadcasted_iota(jnp.int32, (row_tile, LANES), 0)
            sq = jnp.where(row_idx < valid_rows_last, sq, jnp.float32(0.0))
            _accum(sq)

    # One cross-lane/sublane reduce per split, on its last local step only.
    @pl.when(i == steps_per_split - 1)
    def _finalize():
        out_ref[0, 0] = jnp.sum(acc_ref[...])


def log_l2_loss(pred, target, eps=1e-6):
    assert pred.shape == target.shape, "pred/target shapes must match"
    n = pred.size
    p_flat = pred.reshape(-1)
    t_flat = target.reshape(-1)

    rows = n // LANES
    body_n = rows * LANES
    tail = n - body_n

    # Unaligned (<128-element) tail: trivial plain-JAX scalar work, instead of
    # re-materializing padded copies of both full tensors in HBM.
    tail_l2 = jnp.float32(0.0)
    if tail:
        dt = (p_flat[body_n:].astype(jnp.float32)
              - t_flat[body_n:].astype(jnp.float32))
        tail_l2 = jnp.sum(dt * dt)

    if rows == 0:
        # Whole problem is smaller than one lane row; nothing for the kernel.
        return jnp.log(tail_l2 + jnp.float32(eps))

    p2 = (p_flat if tail == 0 else p_flat[:body_n]).reshape(rows, LANES)
    t2 = (t_flat if tail == 0 else t_flat[:body_n]).reshape(rows, LANES)

    # Dtype-aware row tile: ~TARGET_TILE_BYTES per input per pipeline buffer.
    bytes_per_row = LANES * max(pred.dtype.itemsize, target.dtype.itemsize)
    max_row_tile = max(8, (TARGET_TILE_BYTES // bytes_per_row) // 8 * 8)

    if rows <= max_row_tile:
        row_tile = rows          # one block covering the full array
    else:
        row_tile = max_row_tile  # multiple of 8; partial edge block is masked
    total_steps = pl.cdiv(rows, row_tile)

    num_splits = NUM_SPLITS if total_steps >= 2 else 1
    steps_per_split = pl.cdiv(total_steps, num_splits)
    has_empty_steps = num_splits * steps_per_split != total_steps
    valid_rows_last = rows - (total_steps - 1) * row_tile

    if has_empty_steps:
        # Clamp padded steps onto the last valid block (their contribution is
        # skipped inside the kernel; the re-read DMA is one wasted tile).
        def _in_idx(c, i):
            return (jnp.minimum(c * steps_per_split + i, total_steps - 1), 0)
    else:
        def _in_idx(c, i):
            return (c * steps_per_split + i, 0)

    bytes_per_elem = pred.dtype.itemsize + target.dtype.itemsize
    cost = pl.CostEstimate(
        flops=3 * body_n, transcendentals=0,
        bytes_accessed=body_n * bytes_per_elem + num_splits * 4)

    partials = pl.pallas_call(
        functools.partial(
            _logl2_kernel,
            row_tile=row_tile,
            steps_per_split=steps_per_split,
            total_steps=total_steps,
            valid_rows_last=valid_rows_last,
            has_empty_steps=has_empty_steps),
        out_shape=jax.ShapeDtypeStruct((num_splits, 1), jnp.float32),
        grid_spec=pltpu.PrefetchScalarGridSpec(
            num_scalar_prefetch=0,
            grid=(num_splits, steps_per_split),
            in_specs=[
                pl.BlockSpec((row_tile, LANES), _in_idx),
                pl.BlockSpec((row_tile, LANES), _in_idx),
            ],
            out_specs=pl.BlockSpec(
                (1, 1), lambda c, i: (c, 0), memory_space=pltpu.SMEM),
            scratch_shapes=[pltpu.VMEM((8, LANES), jnp.float32)],
        ),
        compiler_params=pltpu.CompilerParams(
            dimension_semantics=("parallel", "arbitrary")),
        cost_estimate=cost,
    )(p2, t2)

    # Final reduction of (at most 2) per-core partials + tail + log: trivial
    # scalar work, done in plain JAX.
    return jnp.log(jnp.sum(partials) + tail_l2 + jnp.float32(eps))


if __name__ == "__main__":
    key = jax.random.PRNGKey(0)
    kp, kt = jax.random.split(key)

    # Small NCHW-like shapes consistent with a typical prediction/target pair.
    shape = (2, 4, 16, 16)
    pred = jax.random.normal(kp, shape, dtype=jnp.float32)
    target = jax.random.normal(kt, shape, dtype=jnp.float32)

    loss = log_l2_loss(pred, target, eps=1e-6)
    loss = jax.block_until_ready(loss)

    # Reference check in plain JAX.
    ref = jnp.log(jnp.sum((pred - target) ** 2) + 1e-6)
    assert jnp.allclose(loss, ref, rtol=1e-5, atol=1e-5), (loss, ref)

    print("KERNEL_OK")
</pallas_src>

<mosaic_0001>
module attributes {stable_mosaic.version = 11 : i64} {
  func.func @_logl2_kernel(%arg0: i32, %arg1: i32, %arg2: memref<16x128xf32, #tpu.memory_space<vmem>>, %arg3: memref<16x128xf32, #tpu.memory_space<vmem>>, %arg4: memref<1x1xf32, #tpu.memory_space<smem>>, %arg5: memref<8x128xf32, #tpu.memory_space<vmem>>) attributes {dimension_semantics = [#tpu.dimension_semantics<parallel>, #tpu.dimension_semantics<arbitrary>], iteration_bounds = array<i64: 1, 1>, scalar_prefetch = 0 : i64, scratch_operands = 1 : i64, tpu.core_type = #tpu.core_type<tc>, window_params = [{transform_indices = @transform_0, window_bounds = array<i64: 16, 128>}, {transform_indices = @transform_1, window_bounds = array<i64: 16, 128>}, {transform_indices = @transform_2, window_bounds = array<i64: 1, 1>}]} {
    %c0_i32 = arith.constant 0 : i32
    %0 = arith.cmpi eq, %arg1, %c0_i32 : i32
    %1 = arith.extui %0 : i1 to i32
    %c0_i32_0 = arith.constant 0 : i32
    %2 = arith.cmpi ne, %1, %c0_i32_0 : i32
    scf.if %2 {
      %cst_10 = arith.constant 0.000000e+00 : f32
      %15 = vector.broadcast %cst_10 : f32 to vector<8x128xf32>
      %c0_11 = arith.constant 0 : index
      %c0_12 = arith.constant 0 : index
      %16 = vector.load %arg5[%c0_11, %c0_12] : memref<8x128xf32, #tpu.memory_space<vmem>>, vector<8x128xf32>
      tpu.vector_store %arg5[%c0_11, %c0_12], %15 {strides = array<i32>} : memref<8x128xf32, #tpu.memory_space<vmem>>, vector<8x128xf32>,
    } else {
    }
    %c0 = arith.constant 0 : index
    %c0_1 = arith.constant 0 : index
    %3 = vector.load %arg2[%c0, %c0_1] : memref<16x128xf32, #tpu.memory_space<vmem>>, vector<16x128xf32>
    %c0_2 = arith.constant 0 : index
    %c0_3 = arith.constant 0 : index
    %4 = vector.load %arg3[%c0_2, %c0_3] : memref<16x128xf32, #tpu.memory_space<vmem>>, vector<16x128xf32>
    %5 = arith.subf %3, %4 : vector<16x128xf32>
    %6 = arith.mulf %5, %5 : vector<16x128xf32>
    %c0_4 = arith.constant 0 : index
    %c0_5 = arith.constant 0 : index
    %7 = vector.load %arg5[%c0_4, %c0_5] : memref<8x128xf32, #tpu.memory_space<vmem>>, vector<8x128xf32>
    %8 = vector.shape_cast %6 : vector<16x128xf32> to vector<2x8x128xf32>
    %cst = arith.constant dense<0.000000e+00> : vector<8x128xf32>
    %9 = vector.multi_reduction <add>, %8, %cst [0] : vector<2x8x128xf32> to vector<8x128xf32>
    %10 = arith.addf %7, %9 : vector<8x128xf32>
    %c0_6 = arith.constant 0 : index
    %c0_7 = arith.constant 0 : index
    %11 = vector.load %arg5[%c0_6, %c0_7] : memref<8x128xf32, #tpu.memory_space<vmem>>, vector<8x128xf32>
    tpu.vector_store %arg5[%c0_6, %c0_7], %10 {strides = array<i32>} : memref<8x128xf32, #tpu.memory_space<vmem>>, vector<8x128xf32>,
    %c0_i32_8 = arith.constant 0 : i32
    %12 = arith.cmpi eq, %arg1, %c0_i32_8 : i32
    %13 = arith.extui %12 : i1 to i32
    %c0_i32_9 = arith.constant 0 : i32
    %14 = arith.cmpi ne, %13, %c0_i32_9 : i32
    scf.if %14 {
      %c0_10 = arith.constant 0 : index
      %c0_11 = arith.constant 0 : index
      %15 = vector.load %arg5[%c0_10, %c0_11] : memref<8x128xf32, #tpu.memory_space<vmem>>, vector<8x128xf32>
      %16 = vector.shape_cast %15 : vector<8x128xf32> to vector<1x8x128xf32>
      %cst_12 = arith.constant dense<0.000000e+00> : vector<1xf32>
      %17 = vector.multi_reduction <add>, %16, %cst_12 [1, 2] : vector<1x8x128xf32> to vector<1xf32>
      %18 = vector.shape_cast %17 : vector<1xf32> to vector<1x1x1xf32>
      %19 = vector.extract %18[0, 0, 0] : f32 from vector<1x1x1xf32>
      %c0_13 = arith.constant 0 : index
      %c0_14 = arith.constant 0 : index
      %20 = memref.load %arg4[%c0_13, %c0_14] : memref<1x1xf32, #tpu.memory_space<smem>>
      memref.store %19, %arg4[%c0_13, %c0_14] : memref<1x1xf32, #tpu.memory_space<smem>>
    } else {
    }
    return
  }
  func.func @transform_0(%arg0: i32, %arg1: i32) -> (i32, i32) {
    %c1_i32 = arith.constant 1 : i32
    %0 = arith.muli %arg0, %c1_i32 : i32
    %1 = arith.addi %0, %arg1 : i32
    %c0_i32 = arith.constant 0 : i32
    %c0_i32_0 = arith.constant 0 : i32
    return %1, %c0_i32 : i32, i32
  }
  func.func @transform_1(%arg0: i32, %arg1: i32) -> (i32, i32) {
    %c1_i32 = arith.constant 1 : i32
    %0 = arith.muli %arg0, %c1_i32 : i32
    %1 = arith.addi %0, %arg1 : i32
    %c0_i32 = arith.constant 0 : i32
    %c0_i32_0 = arith.constant 0 : i32
    return %1, %c0_i32 : i32, i32
  }
  func.func @transform_2(%arg0: i32, %arg1: i32) -> (i32, i32) {
    %c0_i32 = arith.constant 0 : i32
    %c0_i32_0 = arith.constant 0 : i32
    return %arg0, %c0_i32 : i32, i32
  }
}

</mosaic_0001>

<llo_original>
// kernel: tpu_custom_call.1
$region0: #{tpu_custom_call.1}
  #allocation0 [shape = 'u32[]', space=smem, size = 0x4, offset = 0x4, fixed_abs, tag = 'smem constant byte address 0x4 - core index']
  #allocation1 [shape = 'u32[72,128]{1,0:T(1,128)}', space=vmem, size = 0x9000, scoped, tag = 'internal scratch']
  #allocation2 [shape = 'f32[8,128]{1,0:T(8,128)}', space=vmem, size = 0x1000, scoped, tag = 'scratch operand']
  %s0 = inlined_call_operand.hbm [shape: f32[16,128], index: 0, kind: input, shape index: {}]
  %s1 = inlined_call_operand.hbm [shape: f32[16,128], index: 1, kind: input, shape index: {}]
  %s2 = inlined_call_operand.hbm [shape: f32[1,1], index: 2, kind: output, shape index: {}]
  %s3 = sld [smem:[#allocation0]]
  $region34: #{tpu_custom_call.1} parent=0
    _
  %s5 = ssub.s32 1, %s3
  %s6 = scalar_select 0, %s5, %s3
  $region1: #{tpu_custom_call.1} parent=0
    #allocation3 [shape = 'u8[8192]{0}', space=vmem, size = 0x2000, scoped, tag = 'input window, operand 0, single buffered']
    #allocation4 [shape = 's32[1]{0}', space=sflag, size = 0x4, scoped, tag = 'scoped memory for tpu_custom_call.1']
    #allocation5 [shape = 's32[1]{0}', space=sflag, size = 0x4, scoped, tag = 'scoped memory for tpu_custom_call.1']
    #allocation6 [shape = 'u8[8192]{0}', space=vmem, size = 0x2000, scoped, tag = 'input window, operand 1, single buffered']
    #allocation7 [shape = 's32[1]{0}', space=sflag, size = 0x4, scoped, tag = 'scoped memory for tpu_custom_call.1']
    #allocation8 [shape = 'u8[512]{0}', space=smem, size = 0x200, scoped, tag = 'output window, operand 0, single buffered']
    %7 = vsyncpa [#allocation4], 0
    %8 = vsyncpa [#allocation7], 0
    %9 = vsyncpa [#allocation5], 0
    // Predicated region
    $region2: #{tpu_custom_call.1} parent=1 // pred_check
      _
    $region3: #{tpu_custom_call.1} parent=1 // pred_check_branch
      %11 = sbr.rel (0) target = $region5
    $region4: #{tpu_custom_call.1} parent=1 // pred_region
      %s12 = sadd.s32 0, 0
      %s13 = smul.u32 2, %s12
      %15 = vsyncadd [#allocation4], 0
      %s16 = smul.addr %s13, 8
      %s17 = scalar_lea.hbm %s0, %s16
      %s18 = sshll.u32 %s17, 4
      %s19 = int_to_ptr.hbm [resolvable:$true] %s18
      %s20 = sshll.u32 [#allocation3], 4
      %s21 = int_to_ptr.vmem [resolvable:$true] %s20
      %26 = dma.hbm_to_vmem [thread:$0]  %s19, 256, %s21, [#allocation4], 128, 128, 8
    $region5: #{tpu_custom_call.1} parent=1 // pred_fallthru
      _
    // Predicated region
    $region6: #{tpu_custom_call.1} parent=1 // pred_check
      _
    $region7: #{tpu_custom_call.1} parent=1 // pred_check_branch
      %28 = sbr.rel (0) target = $region9
    $region8: #{tpu_custom_call.1} parent=1 // pred_region
      %s29 = sadd.s32 0, 0
      %s30 = smul.u32 2, %s29
      %32 = vsyncadd [#allocation7], 0
      %s33 = smul.addr %s30, 8
      %s34 = scalar_lea.hbm %s1, %s33
      %s35 = sshll.u32 %s34, 4
      %s36 = int_to_ptr.hbm [resolvable:$true] %s35
      %s37 = sshll.u32 [#allocation6], 4
      %s38 = int_to_ptr.vmem [resolvable:$true] %s37
      %43 = dma.hbm_to_vmem [thread:$0]  %s36, 256, %s38, [#allocation7], 128, 128, 8
    $region9: #{tpu_custom_call.1} parent=1 // pred_fallthru
      _
    // Predicated region
    $region10: #{tpu_custom_call.1} parent=1 // pred_check
      _
    $region11: #{tpu_custom_call.1} parent=1 // pred_check_branch
      %45 = sbr.rel (0) target = $region13
    $region12: #{tpu_custom_call.1} parent=1 // pred_region
      %47 = dma.done [#allocation4], 256
    $region13: #{tpu_custom_call.1} parent=1 // pred_fallthru
      _
    // Predicated region
    $region14: #{tpu_custom_call.1} parent=1 // pred_check
      _
    $region15: #{tpu_custom_call.1} parent=1 // pred_check_branch
      %49 = sbr.rel (0) target = $region17
    $region16: #{tpu_custom_call.1} parent=1 // pred_region
      %51 = dma.done [#allocation7], 256
    $region17: #{tpu_custom_call.1} parent=1 // pred_fallthru
      _
    %s52 = sadd.s32 0, 0
    %s53 = smul.u32 2, %s52
    %s54 = sadd.s32 0, 0
    %s55 = smul.u32 2, %s54
    %p56 = scmp.eq.s32.totalorder 0, 0
    // Predicated region
    $region18: #{tpu_custom_call.1} parent=1 // pred_check
      %p57 = pneg %p56
    $region19: #{tpu_custom_call.1} parent=1 // pred_check_branch
      %59 = sbr.rel (%p57) target = $region21
    $region20: #{tpu_custom_call.1} parent=1 // pred_region
      %60 = vst [vmem:[#allocation2] sm:$0xff] 0.0
    $region21: #{tpu_custom_call.1} parent=1 // pred_fallthru
      _
    %v61 = vld [vmem:[#allocation3] sm:$0xff]
    %v62 = vld [vmem:[#allocation3 + $0x8] sm:$0xff]
    %v63 = vld [vmem:[#allocation6] sm:$0xff]
    %v64 = vld [vmem:[#allocation6 + $0x8] sm:$0xff]
    %v65 = vsub.f32 %v61, %v63
    %v66 = vsub.f32 %v62, %v64
    %v67 = vmul.f32 %v65, %v65
    %v68 = vmul.f32 %v66, %v66
    %v69 = vld [vmem:[#allocation2] sm:$0xff]
    %v70 = vadd.f32 %v67, %v68
    %v71 = vadd.f32 %v69, %v70
    %72 = vst [vmem:[#allocation2] sm:$0xff] %v71
    // Predicated region
    $region22: #{tpu_custom_call.1} parent=1 // pred_check
      %p73 = pneg %p56
    $region23: #{tpu_custom_call.1} parent=1 // pred_check_branch
      %75 = sbr.rel (%p73) target = $region25
    $region24: #{tpu_custom_call.1} parent=1 // pred_region
      %v76 = vld [vmem:[#allocation2] sm:$0xff]
      %77 = vadd.xlane.f32.xlu0 %v76
      %v78 = vpop.xlane.xlu0 %77
      %v79 = vrot.slane %v78, 4
      %v80 = vadd.f32 %v78, %v79
      %v81 = vrot.slane %v80, 2
      %v82 = vadd.f32 %v80, %v81
      %v83 = vrot.slane %v82, 1
      %v84 = vadd.f32 %v82, %v83
      %s85 = vtos %v84
      %s86 = scalar_lea.smem [#allocation8], 0
      %87 = sst [smem:[%s86]] %s85
    $region25: #{tpu_custom_call.1} parent=1 // pred_fallthru
      _
    // Predicated region
    $region26: #{tpu_custom_call.1} parent=1 // pred_check
      _
    $region27: #{tpu_custom_call.1} parent=1 // pred_check_branch
      %89 = sbr.rel (0) target = $region29
    $region28: #{tpu_custom_call.1} parent=1 // pred_region
      %91 = vsyncadd [#allocation5], 0
      %s93 = sshll.u32 %s2, 4
      %s94 = int_to_ptr.hbm [resolvable:$true] %s93
      %96 = dma.smem_to_hbm [#allocation8], 16, %s94, [#allocation5]
    $region29: #{tpu_custom_call.1} parent=1 // pred_fallthru
      _
    // Predicated region
    $region30: #{tpu_custom_call.1} parent=1 // pred_check
      _
    $region31: #{tpu_custom_call.1} parent=1 // pred_check_branch
      %98 = sbr.rel (0) target = $region33
    $region32: #{tpu_custom_call.1} parent=1 // pred_region
      %100 = dma.done [#allocation5], 16
    $region33: #{tpu_custom_call.1} parent=1 // pred_fallthru
      _
    %101 = sfence
    %102 = vsyncpa [#allocation4], 1
    %103 = vsyncpa [#allocation7], 1
    %104 = vsyncpa [#allocation5], 1

</llo_original>
